<compile_context>
chip_gen: v7x
topology: tpu7x:2x2x1
jax: 0.10.0
libtpu: 0.0.40
codegen_flags: <defaults>
</compile_context>

<pallas_src>
import functools

import jax
import jax.numpy as jnp
from jax.experimental import pallas as pl
from jax.experimental.pallas import tpu as pltpu


# -----------------------------------------------------------------------------
# Glue: bilinear interpolation (align_corners=False, PyTorch semantics)
# -----------------------------------------------------------------------------
def bilinear_resize_nchw(x, out_h, out_w):
    """F.interpolate(x, [out_h, out_w], mode='bilinear', align_corners=False)."""
    N, C, H, W = x.shape
    x = x.astype(jnp.float32)

    def src_index(out_size, in_size):
        scale = in_size / out_size
        s = (jnp.arange(out_size, dtype=jnp.float32) + 0.5) * scale - 0.5
        s = jnp.maximum(s, 0.0)                       # PyTorch clamps negatives to 0
        i0 = jnp.minimum(jnp.floor(s).astype(jnp.int32), in_size - 1)
        i1 = jnp.minimum(i0 + 1, in_size - 1)
        w1 = s - i0.astype(jnp.float32)
        w0 = 1.0 - w1
        return i0, i1, w0, w1

    y0, y1, wy0, wy1 = src_index(out_h, H)
    x0, x1, wx0, wx1 = src_index(out_w, W)

    top = x[:, :, y0, :]                              # (N, C, out_h, W)
    bot = x[:, :, y1, :]
    rows = top * wy0[None, None, :, None] + bot * wy1[None, None, :, None]
    left = rows[:, :, :, x0]                          # (N, C, out_h, out_w)
    right = rows[:, :, :, x1]
    return left * wx0[None, None, None, :] + right * wx1[None, None, None, :]


# -----------------------------------------------------------------------------
# Fused Pallas kernel: conv-as-matmul + BatchNorm (batch stats) + ReLU
# -----------------------------------------------------------------------------
def _conv_bn_relu_kernel(cols_ref, w_ref, gamma_ref, beta_ref, out_ref, *, eps, inv_m):
    # cols_ref : (1, 9*C, S*S)   w_ref: (C, 9*C)
    # gamma/beta: (C, 1)         out_ref: (N, C, S*S)  (resident across the grid)
    n = pl.program_id(0)

    # 3x3 conv as a lane-dense matmul: (C, 9C) @ (9C, S*S) -> (C, S*S)
    acc = jnp.dot(w_ref[...], cols_ref[0], preferred_element_type=jnp.float32)
    out_ref[n] = acc

    # Last grid step: the full conv output lives in VMEM -> compute batch
    # statistics and apply the BN affine + ReLU in place (written to HBM once).
    @pl.when(n == pl.num_programs(0) - 1)
    def _():
        conv = out_ref[...]                                     # (N, C, S*S)
        s_lane = jnp.sum(conv, axis=2, keepdims=True)           # (N, C, 1) lane reduce
        q_lane = jnp.sum(conv * conv, axis=2, keepdims=True)    # (N, C, 1)
        mean = jnp.sum(s_lane, axis=0, keepdims=True) * inv_m   # (1, C, 1)
        e_x2 = jnp.sum(q_lane, axis=0, keepdims=True) * inv_m   # (1, C, 1)
        var = jnp.maximum(e_x2 - mean * mean, 0.0)              # clamp: no NaN in rsqrt
        scale = gamma_ref[...][None] * jax.lax.rsqrt(var + eps)  # (1, C, 1)
        shift = beta_ref[...][None] - mean * scale
        out_ref[...] = jnp.maximum(conv * scale + shift, 0.0)


# -----------------------------------------------------------------------------
# Wrapper
# -----------------------------------------------------------------------------
@functools.partial(jax.jit, static_argnames=("assign", "eps"))
def upsample_module_forward(x, conv_w, gamma, beta, *, assign, eps=1e-5):
    """x: (N, C, H, W) f32.  conv_w: (C, C, 3, 3) torch layout (Cout, Cin, kH, kW).
    gamma/beta: (C,).  Returns (N, C, assign, assign) f32 (BN in training mode)."""
    N, C, H, W = x.shape
    S = assign

    # 1) bilinear upsample (glue, plain JAX)
    xr = bilinear_resize_nchw(x, S, S)                               # (N, C, S, S)

    # 2) im2col in the lane-dense (9*Cin, S*S) orientation (glue): pad=1, 3x3 taps
    xp = jnp.pad(xr, ((0, 0), (0, 0), (1, 1), (1, 1)))               # (N, C, S+2, S+2)
    cols = jnp.concatenate(
        [xp[:, :, dy:dy + S, dx:dx + S].reshape(N, C, S * S)
         for dy in range(3) for dx in range(3)],
        axis=1,
    )                                                                # (N, 9*C, S*S)
    # TODO(synk): for large `assign`, fold the im2col into the kernel (shifted dots
    # on a VMEM-resident padded tile) and tile the S*S axis to fit v7x VMEM / use
    # a parallel grid axis for the second TensorCore.

    # weight matrix: rows ordered (kh, kw, cin) to match the im2col row order
    w_mat = jnp.transpose(conv_w, (0, 2, 3, 1)).reshape(C, 9 * C)    # (Cout, 9*Cin)
    gamma2 = gamma.reshape(C, 1).astype(jnp.float32)
    beta2 = beta.reshape(C, 1).astype(jnp.float32)

    kernel = functools.partial(
        _conv_bn_relu_kernel, eps=float(eps), inv_m=1.0 / float(N * S * S))

    y = pl.pallas_call(
        kernel,
        out_shape=jax.ShapeDtypeStruct((N, C, S * S), jnp.float32),
        grid_spec=pltpu.PrefetchScalarGridSpec(
            num_scalar_prefetch=0,
            grid=(N,),
            in_specs=[
                pl.BlockSpec((1, 9 * C, S * S), lambda n: (n, 0, 0)),
                pl.BlockSpec((C, 9 * C), lambda n: (0, 0)),
                pl.BlockSpec((C, 1), lambda n: (0, 0)),
                pl.BlockSpec((C, 1), lambda n: (0, 0)),
            ],
            # output block is the whole (N, C, S*S) array, resident in VMEM across
            # the grid -> written back to HBM once, after BN+ReLU on the last step.
            out_specs=pl.BlockSpec((N, C, S * S), lambda n: (0, 0, 0)),
        ),
        compiler_params=pltpu.CompilerParams(
            dimension_semantics=("arbitrary",)),
    )(cols, w_mat, gamma2, beta2)

    # already NCHW: just split the flattened spatial dim (free reshape)
    return y.reshape(N, C, S, S)


if __name__ == "__main__":
    key = jax.random.PRNGKey(0)
    N, C, H, W = 2, 4, 16, 16
    assign = 24

    k1, k2 = jax.random.split(key)
    x = jax.random.normal(k1, (N, C, H, W), dtype=jnp.float32)
    # deterministic synthetic parameters (shapes per nn.Conv2d(C, C, 3) / nn.BatchNorm2d(C))
    conv_w = 0.1 * jax.random.normal(k2, (C, C, 3, 3), dtype=jnp.float32)
    gamma = jnp.ones((C,), dtype=jnp.float32)   # BN weight init
    beta = jnp.zeros((C,), dtype=jnp.float32)   # BN bias init

    y = upsample_module_forward(x, conv_w, gamma, beta, assign=assign)
    jax.block_until_ready(y)
    assert y.shape == (N, C, assign, assign), y.shape
    assert bool(jnp.all(y >= 0.0))  # ReLU output sanity

    # pure-JAX/XLA reference (same semantics) for a loose numerical sanity check
    xr_ref = bilinear_resize_nchw(x, assign, assign)
    conv_ref = jax.lax.conv_general_dilated(
        xr_ref, conv_w, window_strides=(1, 1), padding=((1, 1), (1, 1)),
        dimension_numbers=("NCHW", "OIHW", "NCHW"))
    mu = conv_ref.mean(axis=(0, 2, 3), keepdims=True)
    var = conv_ref.var(axis=(0, 2, 3), keepdims=True)
    ref = jnp.maximum(
        (conv_ref - mu) / jnp.sqrt(var + 1e-5)
        * gamma.reshape(1, C, 1, 1) + beta.reshape(1, C, 1, 1), 0.0)
    assert bool(jnp.allclose(y, ref, atol=1e-2, rtol=1e-2))

    print("KERNEL_OK")
</pallas_src>

<mosaic_0001>
module attributes {stable_mosaic.version = 11 : i64} {
  func.func @_conv_bn_relu_kernel(%arg0: i32, %arg1: memref<1x36x576xf32, #tpu.memory_space<vmem>>, %arg2: memref<4x36xf32, #tpu.memory_space<vmem>>, %arg3: memref<4x1xf32, #tpu.memory_space<vmem>>, %arg4: memref<4x1xf32, #tpu.memory_space<vmem>>, %arg5: memref<2x4x576xf32, #tpu.memory_space<vmem>>) attributes {dimension_semantics = [#tpu.dimension_semantics<arbitrary>], iteration_bounds = array<i64: 2>, scalar_prefetch = 0 : i64, scratch_operands = 0 : i64, tpu.core_type = #tpu.core_type<tc>, window_params = [{transform_indices = @transform_0, window_bounds = array<i64: 1, 36, 576>}, {pipeline_mode = #tpu.pipeline_mode<synchronous>, transform_indices = @transform_1, window_bounds = array<i64: 4, 36>}, {pipeline_mode = #tpu.pipeline_mode<synchronous>, transform_indices = @transform_2, window_bounds = array<i64: 4, 1>}, {pipeline_mode = #tpu.pipeline_mode<synchronous>, transform_indices = @transform_3, window_bounds = array<i64: 4, 1>}, {pipeline_mode = #tpu.pipeline_mode<synchronous>, transform_indices = @transform_4, window_bounds = array<i64: 2, 4, 576>}]} {
    %c0 = arith.constant 0 : index
    %c0_0 = arith.constant 0 : index
    %0 = vector.load %arg2[%c0, %c0_0] : memref<4x36xf32, #tpu.memory_space<vmem>>, vector<4x36xf32>
    %c0_1 = arith.constant 0 : index
    %c0_2 = arith.constant 0 : index
    %c0_3 = arith.constant 0 : index
    %1 = vector.load %arg1[%c0_1, %c0_2, %c0_3] : memref<1x36x576xf32, #tpu.memory_space<vmem>>, vector<1x36x576xf32>
    %2 = vector.shape_cast %1 : vector<1x36x576xf32> to vector<36x576xf32>
    %cst = arith.constant dense<0.000000e+00> : vector<4x576xf32>
    %3 = tpu.matmul %0, %2, %cst {dimension_numbers = #tpu.dot_dimension_numbers<[1], [0], [0], [1], [0, 0, 1, 1], [], []>} : vector<4x36xf32>, vector<36x576xf32>, vector<4x576xf32> -> vector<4x576xf32>
    %4 = arith.index_cast %arg0 : i32 to index
    %c0_4 = arith.constant 0 : index
    %c0_5 = arith.constant 0 : index
    %5 = vector.load %arg5[%4, %c0_4, %c0_5] : memref<2x4x576xf32, #tpu.memory_space<vmem>>, vector<1x4x576xf32>
    %6 = vector.shape_cast %5 : vector<1x4x576xf32> to vector<4x576xf32>
    %7 = vector.shape_cast %3 : vector<4x576xf32> to vector<1x4x576xf32>
    tpu.vector_store %arg5[%4, %c0_4, %c0_5], %7 {strides = array<i32>} : memref<2x4x576xf32, #tpu.memory_space<vmem>>, vector<1x4x576xf32>,
    %c1_i32 = arith.constant 1 : i32
    %8 = arith.cmpi eq, %arg0, %c1_i32 : i32
    %9 = arith.extui %8 : i1 to i32
    %c0_i32 = arith.constant 0 : i32
    %10 = arith.cmpi ne, %9, %c0_i32 : i32
    scf.if %10 {
      %c0_6 = arith.constant 0 : index
      %c0_7 = arith.constant 0 : index
      %c0_8 = arith.constant 0 : index
      %11 = vector.load %arg5[%c0_6, %c0_7, %c0_8] : memref<2x4x576xf32, #tpu.memory_space<vmem>>, vector<2x4x576xf32>
      %cst_9 = arith.constant dense<0.000000e+00> : vector<2x4xf32>
      %12 = vector.multi_reduction <add>, %11, %cst_9 [2] : vector<2x4x576xf32> to vector<2x4xf32>
      %13 = vector.shape_cast %12 : vector<2x4xf32> to vector<2x4x1xf32>
      %14 = arith.mulf %11, %11 : vector<2x4x576xf32>
      %cst_10 = arith.constant dense<0.000000e+00> : vector<2x4xf32>
      %15 = vector.multi_reduction <add>, %14, %cst_10 [2] : vector<2x4x576xf32> to vector<2x4xf32>
      %16 = vector.shape_cast %15 : vector<2x4xf32> to vector<2x4x1xf32>
      %cst_11 = arith.constant dense<0.000000e+00> : vector<4x1xf32>
      %17 = vector.multi_reduction <add>, %13, %cst_11 [0] : vector<2x4x1xf32> to vector<4x1xf32>
      %18 = vector.shape_cast %17 : vector<4x1xf32> to vector<1x4x1xf32>
      %cst_12 = arith.constant 8.68055562E-4 : f32
      %19 = vector.broadcast %cst_12 : f32 to vector<1x4x1xf32>
      %20 = arith.mulf %18, %19 : vector<1x4x1xf32>
      %cst_13 = arith.constant dense<0.000000e+00> : vector<4x1xf32>
      %21 = vector.multi_reduction <add>, %16, %cst_13 [0] : vector<2x4x1xf32> to vector<4x1xf32>
      %22 = vector.shape_cast %21 : vector<4x1xf32> to vector<1x4x1xf32>
      %cst_14 = arith.constant 8.68055562E-4 : f32
      %23 = vector.broadcast %cst_14 : f32 to vector<1x4x1xf32>
      %24 = arith.mulf %22, %23 : vector<1x4x1xf32>
      %25 = arith.mulf %20, %20 : vector<1x4x1xf32>
      %26 = arith.subf %24, %25 : vector<1x4x1xf32>
      %cst_15 = arith.constant 0.000000e+00 : f32
      %27 = vector.broadcast %cst_15 : f32 to vector<1x4x1xf32>
      %28 = arith.maximumf %26, %27 : vector<1x4x1xf32>
      %c0_16 = arith.constant 0 : index
      %c0_17 = arith.constant 0 : index
      %29 = vector.load %arg3[%c0_16, %c0_17] : memref<4x1xf32, #tpu.memory_space<vmem>>, vector<4x1xf32>
      %30 = vector.shape_cast %29 : vector<4x1xf32> to vector<1x4x1xf32>
      %cst_18 = arith.constant 9.99999974E-6 : f32
      %31 = vector.broadcast %cst_18 : f32 to vector<1x4x1xf32>
      %32 = arith.addf %28, %31 : vector<1x4x1xf32>
      %33 = math.rsqrt %32 : vector<1x4x1xf32>
      %34 = arith.mulf %30, %33 : vector<1x4x1xf32>
      %c0_19 = arith.constant 0 : index
      %c0_20 = arith.constant 0 : index
      %35 = vector.load %arg4[%c0_19, %c0_20] : memref<4x1xf32, #tpu.memory_space<vmem>>, vector<4x1xf32>
      %36 = vector.shape_cast %35 : vector<4x1xf32> to vector<1x4x1xf32>
      %37 = arith.mulf %20, %34 : vector<1x4x1xf32>
      %38 = arith.subf %36, %37 : vector<1x4x1xf32>
      %39 = vector.broadcast %34 : vector<1x4x1xf32> to vector<2x4x576xf32>
      %40 = arith.mulf %11, %39 : vector<2x4x576xf32>
      %41 = vector.broadcast %38 : vector<1x4x1xf32> to vector<2x4x576xf32>
      %42 = arith.addf %40, %41 : vector<2x4x576xf32>
      %cst_21 = arith.constant 0.000000e+00 : f32
      %43 = vector.broadcast %cst_21 : f32 to vector<2x4x576xf32>
      %44 = arith.maximumf %42, %43 : vector<2x4x576xf32>
      %c0_22 = arith.constant 0 : index
      %c0_23 = arith.constant 0 : index
      %c0_24 = arith.constant 0 : index
      %45 = vector.load %arg5[%c0_22, %c0_23, %c0_24] : memref<2x4x576xf32, #tpu.memory_space<vmem>>, vector<2x4x576xf32>
      tpu.vector_store %arg5[%c0_22, %c0_23, %c0_24], %44 {strides = array<i32>} : memref<2x4x576xf32, #tpu.memory_space<vmem>>, vector<2x4x576xf32>,
    } else {
    }
    return
  }
  func.func @transform_0(%arg0: i32) -> (i32, i32, i32) {
    %c0_i32 = arith.constant 0 : i32
    %c0_i32_0 = arith.constant 0 : i32
    %c0_i32_1 = arith.constant 0 : i32
    return %arg0, %c0_i32, %c0_i32_0 : i32, i32, i32
  }
  func.func @transform_1(%arg0: i32) -> (i32, i32) {
    %c0_i32 = arith.constant 0 : i32
    %c0_i32_0 = arith.constant 0 : i32
    %c0_i32_1 = arith.constant 0 : i32
    return %c0_i32, %c0_i32_0 : i32, i32
  }
  func.func @transform_2(%arg0: i32) -> (i32, i32) {
    %c0_i32 = arith.constant 0 : i32
    %c0_i32_0 = arith.constant 0 : i32
    %c0_i32_1 = arith.constant 0 : i32
    return %c0_i32, %c0_i32_0 : i32, i32
  }
  func.func @transform_3(%arg0: i32) -> (i32, i32) {
    %c0_i32 = arith.constant 0 : i32
    %c0_i32_0 = arith.constant 0 : i32
    %c0_i32_1 = arith.constant 0 : i32
    return %c0_i32, %c0_i32_0 : i32, i32
  }
  func.func @transform_4(%arg0: i32) -> (i32, i32, i32) {
    %c0_i32 = arith.constant 0 : i32
    %c0_i32_0 = arith.constant 0 : i32
    %c0_i32_1 = arith.constant 0 : i32
    %c0_i32_2 = arith.constant 0 : i32
    return %c0_i32, %c0_i32_0, %c0_i32_1 : i32, i32, i32
  }
}

</mosaic_0001>

<llo_original>
// kernel: upsample_module_forward.1
$region0: #{upsample_module_forward.1}
  #allocation0 [shape = 'u32[]', space=smem, size = 0x4, offset = 0x4, fixed_abs, tag = 'smem constant byte address 0x4 - core index']
  #allocation1 [shape = 'u32[144,128]{1,0:T(1,128)}', space=vmem, size = 0x12000, scoped, tag = 'internal scratch']
  %s0 = inlined_call_operand.vmem [shape: f32[2,36,576], index: 0, kind: input, shape index: {}]
  %s1 = inlined_call_operand.vmem [shape: f32[4,36], index: 1, kind: input, shape index: {}]
  %s2 = inlined_call_operand.vmem [shape: f32[4,1], index: 2, kind: input, shape index: {}]
  %s3 = inlined_call_operand.vmem [shape: f32[4,1], index: 3, kind: input, shape index: {}]
  %s4 = inlined_call_operand.vmem [shape: f32[2,4,576], index: 4, kind: output, shape index: {}]
  %s5 = sld [smem:[#allocation0]]
  $region53: #{upsample_module_forward.1} parent=0
    _
  %s7 = ssub.s32 1, %s5
  %s8 = scalar_select 0, %s7, %s5
  loop: start=0, step=1, limit=4
  $region2: #{upsample_module_forward.1} parent=0 // loop_pre_header
    _
  $region3: #{upsample_module_forward.1} parent=0 // loop_header
    %s10 = sphi 0, %s14
    %p11 = scmp.ge.s32.totalorder %s10, 4
    %s20 = sphi 0, %s22
    %s23 = sphi 0, %s20
    %s24 = sphi 0, %s23
    %s40 = sphi 0, %s24
    %s44 = sphi 0, %s44
    %s46 = sphi 0, %s44
    %s47 = sphi 0, %s46
    %s61 = sphi 0, %s47
    %s65 = sphi 0, %s65
    %s67 = sphi 0, %s65
    %s68 = sphi 0, %s67
    %s82 = sphi 0, %s68
    %s86 = sphi 0, %s86
    %s88 = sphi 0, %s86
    %s89 = sphi 0, %s88
    %s103 = sphi 0, %s89
    %s107 = sphi 0, %s107
    %s109 = sphi 0, %s107
    %s110 = sphi 0, %s109
    %s124 = sphi 0, %s110
  $region4: #{upsample_module_forward.1} parent=0 // loop_header_branch
    %13 = sbr.rel (%p11) target = $region8
  $region5: #{upsample_module_forward.1} parent=0 // loop_body
    %s15 = ssub.s32 %s10, 1
    %s16 = ssub.s32 %s10, 2
    %s17 = sadd.s32 %s10, 1
    %s18 = ssub.s32 %s10, %s17
    %p19 = scmp.eq.s32.totalorder %s18, 0
    %s21 = sadd.s32 %s20, 1
    %s22 = scalar_select %p19, %s20, %s21
    %p25 = pneg %p19
    %p26 = scmp.eq.s32.totalorder %s10, 1
    %p27 = por %p25, %p26
    %p28 = scmp.ne.s32.totalorder %s20, %s23
    %p29 = scmp.eq.s32.totalorder %s10, 0
    %p30 = por %p28, %p29
    %p31 = scmp.ne.s32.totalorder %s20, %s23
    %p32 = scmp.eq.s32.totalorder %s15, 1
    %p33 = por %p31, %p32
    %p34 = scmp.ne.s32.totalorder %s23, %s24
    %p35 = scmp.eq.s32.totalorder %s15, 0
    %p36 = por %p34, %p35
    %p37 = scmp.ne.s32.totalorder %s23, %s24
    %p38 = scmp.eq.s32.totalorder %s16, 1
    %p39 = por %p37, %p38
    %p41 = scmp.ne.s32.totalorder %s24, %s40
    %p42 = scmp.eq.s32.totalorder %s16, 0
    %p43 = por %p41, %p42
    %s45 = sadd.s32 %s44, 1
    %p48 = scmp.eq.s32.totalorder %s10, 1
    %p49 = scmp.ne.s32.totalorder %s44, %s46
    %p50 = scmp.eq.s32.totalorder %s10, 0
    %p51 = por %p49, %p50
    %p52 = scmp.ne.s32.totalorder %s44, %s46
    %p53 = scmp.eq.s32.totalorder %s15, 1
    %p54 = por %p52, %p53
    %p55 = scmp.ne.s32.totalorder %s46, %s47
    %p56 = scmp.eq.s32.totalorder %s15, 0
    %p57 = por %p55, %p56
    %p58 = scmp.ne.s32.totalorder %s46, %s47
    %p59 = scmp.eq.s32.totalorder %s16, 1
    %p60 = por %p58, %p59
    %p62 = scmp.ne.s32.totalorder %s47, %s61
    %p63 = scmp.eq.s32.totalorder %s16, 0
    %p64 = por %p62, %p63
    %s66 = sadd.s32 %s65, 1
    %p69 = scmp.eq.s32.totalorder %s10, 1
    %p70 = scmp.ne.s32.totalorder %s65, %s67
    %p71 = scmp.eq.s32.totalorder %s10, 0
    %p72 = por %p70, %p71
    %p73 = scmp.ne.s32.totalorder %s65, %s67
    %p74 = scmp.eq.s32.totalorder %s15, 1
    %p75 = por %p73, %p74
    %p76 = scmp.ne.s32.totalorder %s67, %s68
    %p77 = scmp.eq.s32.totalorder %s15, 0
    %p78 = por %p76, %p77
    %p79 = scmp.ne.s32.totalorder %s67, %s68
    %p80 = scmp.eq.s32.totalorder %s16, 1
    %p81 = por %p79, %p80
    %p83 = scmp.ne.s32.totalorder %s68, %s82
    %p84 = scmp.eq.s32.totalorder %s16, 0
    %p85 = por %p83, %p84
    %s87 = sadd.s32 %s86, 1
    %p90 = scmp.eq.s32.totalorder %s10, 1
    %p91 = scmp.ne.s32.totalorder %s86, %s88
    %p92 = scmp.eq.s32.totalorder %s10, 0
    %p93 = por %p91, %p92
    %p94 = scmp.ne.s32.totalorder %s86, %s88
    %p95 = scmp.eq.s32.totalorder %s15, 1
    %p96 = por %p94, %p95
    %p97 = scmp.ne.s32.totalorder %s88, %s89
    %p98 = scmp.eq.s32.totalorder %s15, 0
    %p99 = por %p97, %p98
    %p100 = scmp.ne.s32.totalorder %s88, %s89
    %p101 = scmp.eq.s32.totalorder %s16, 1
    %p102 = por %p100, %p101
    %p104 = scmp.ne.s32.totalorder %s89, %s103
    %p105 = scmp.eq.s32.totalorder %s16, 0
    %p106 = por %p104, %p105
    %s108 = sadd.s32 %s107, 1
    %p111 = scmp.eq.s32.totalorder %s10, 1
    %p112 = scmp.ne.s32.totalorder %s107, %s109
    %p113 = scmp.eq.s32.totalorder %s10, 0
    %p114 = por %p112, %p113
    %p115 = scmp.ne.s32.totalorder %s107, %s109
    %p116 = scmp.eq.s32.totalorder %s15, 1
    %p117 = por %p115, %p116
    %p118 = scmp.ne.s32.totalorder %s109, %s110
    %p119 = scmp.eq.s32.totalorder %s15, 0
    %p120 = por %p118, %p119
    %p121 = scmp.ne.s32.totalorder %s109, %s110
    %p122 = scmp.eq.s32.totalorder %s16, 1
    %p123 = por %p121, %p122
    %p125 = scmp.ne.s32.totalorder %s110, %s124
    %p126 = scmp.eq.s32.totalorder %s16, 0
    %p127 = por %p125, %p126
    %p128 = scmp.le.s32.totalorder 1, %s10
    %p129 = scmp.lt.s32.totalorder %s10, 3
    %p130 = pnand %p128, %p129
    %p131 = pneg %p130
    // Predicated region
    $region9: #{upsample_module_forward.1} parent=5 // pred_check
      _
    $region10: #{upsample_module_forward.1} parent=5 // pred_check_branch
      %133 = sbr.rel (%p130) target = $region12
    $region11: #{upsample_module_forward.1} parent=5 // pred_region
      %s134 = ssub.s32 %s10, 1
      // Predicated region
      $region13: #{upsample_module_forward.1} parent=11 // pred_check
        %p135 = pneg %p57
      $region14: #{upsample_module_forward.1} parent=11 // pred_check_branch
        %137 = sbr.rel (%p135) target = $region16
      $region15: #{upsample_module_forward.1} parent=11 // pred_region
        _
      $region16: #{upsample_module_forward.1} parent=11 // pred_fallthru
        _
      // Predicated region
      $region17: #{upsample_module_forward.1} parent=11 // pred_check
        %p138 = pneg %p78
      $region18: #{upsample_module_forward.1} parent=11 // pred_check_branch
        %140 = sbr.rel (%p138) target = $region20
      $region19: #{upsample_module_forward.1} parent=11 // pred_region
        _
      $region20: #{upsample_module_forward.1} parent=11 // pred_fallthru
        _
      // Predicated region
      $region21: #{upsample_module_forward.1} parent=11 // pred_check
        %p141 = pneg %p99
      $region22: #{upsample_module_forward.1} parent=11 // pred_check_branch
        %143 = sbr.rel (%p141) target = $region24
      $region23: #{upsample_module_forward.1} parent=11 // pred_region
        _
      $region24: #{upsample_module_forward.1} parent=11 // pred_fallthru
        _
    $region12: #{upsample_module_forward.1} parent=5 // pred_fallthru
      _
    %p144 = scmp.lt.s32.totalorder %s10, 2
    // Predicated region
    $region25: #{upsample_module_forward.1} parent=5 // pred_check
      %p145 = pneg %p144
    $region26: #{upsample_module_forward.1} parent=5 // pred_check_branch
      %147 = sbr.rel (%p145) target = $region28
    $region27: #{upsample_module_forward.1} parent=5 // pred_region
      // Predicated region
      $region29: #{upsample_module_forward.1} parent=27 // pred_check
        %p148 = pneg %p30
      $region30: #{upsample_module_forward.1} parent=27 // pred_check_branch
        %150 = sbr.rel (%p148) target = $region32
      $region31: #{upsample_module_forward.1} parent=27 // pred_region
        %p151 = scmp.lt.s32.totalorder %s10, 1
        %s152 = scalar_select %p151, %s10, 1
        %s153 = smul.addr %s152, 25
        %s154 = smul.addr %s153, 8
        %s155 = scalar_lea.vmem %s0, %s154
      $region32: #{upsample_module_forward.1} parent=27 // pred_fallthru
        _
    $region28: #{upsample_module_forward.1} parent=5 // pred_fallthru
      _
    %p156 = scmp.le.s32.totalorder 1, %s10
    %p157 = scmp.lt.s32.totalorder %s10, 3
    %p158 = pnand %p156, %p157
    %p159 = pneg %p158
    // Predicated region
    $region33: #{upsample_module_forward.1} parent=5 // pred_check
      _
    $region34: #{upsample_module_forward.1} parent=5 // pred_check_branch
      %161 = sbr.rel (%p158) target = $region36
    $region35: #{upsample_module_forward.1} parent=5 // pred_region
      %s162 = ssub.s32 %s10, 1
      %p163 = scmp.lt.s32.totalorder %s15, 1
      %s164 = scalar_select %p163, %s15, 1
      %s165 = smul.addr %s164, 25
      %s166 = smul.addr %s165, 8
      %s167 = scalar_lea.vmem %s0, %s166
      %p168 = pneg %p36
      %p169 = pneg %p33
      %p170 = pneg %p57
      %p171 = pneg %p54
      %p172 = pneg %p78
      %p173 = pneg %p75
      %p174 = pneg %p99
      %p175 = pneg %p96
      %p176 = pneg %p120
      %p177 = pneg %p117
      %p178 = scmp.lt.s32.totalorder %s15, 1
      %s179 = scalar_select %p178, %s15, 1
      %s180 = smul.addr %s179, 25
      %s181 = smul.addr %s180, 8
      %s182 = scalar_lea.vmem %s0, %s181
      %v183 = vld [vmem:[%s1] sm:$0xf]
      %v184 = vld [vmem:[%s182] sm:$0xff]
      %v185 = vld [vmem:[%s182 + $0x8] sm:$0xff]
      %v186 = vld [vmem:[%s182 + $0x10] sm:$0xff]
      %v187 = vld [vmem:[%s182 + $0x18] sm:$0xff]
      %v188 = vld [vmem:[%s182 + $0x20] sm:$0xff]
      %v189 = vld [vmem:[%s182 + $0x28] sm:$0xff]
      %v190 = vld [vmem:[%s182 + $0x30] sm:$0xff]
      %v191 = vld [vmem:[%s182 + $0x38] sm:$0xff]
      %v192 = vld [vmem:[%s182 + $0x40] sm:$0xff]
      %v193 = vld [vmem:[%s182 + $0x48] sm:$0xff]
      %v194 = vld [vmem:[%s182 + $0x50] sm:$0xff]
      %v195 = vld [vmem:[%s182 + $0x58] sm:$0xff]
      %v196 = vld [vmem:[%s182 + $0x60] sm:$0xff]
      %v197 = vld [vmem:[%s182 + $0x68] sm:$0xff]
      %v198 = vld [vmem:[%s182 + $0x70] sm:$0xff]
      %v199 = vld [vmem:[%s182 + $0x78] sm:$0xff]
      %v200 = vld [vmem:[%s182 + $0x80] sm:$0xff]
      %v201 = vld [vmem:[%s182 + $0x88] sm:$0xff]
      %v202 = vld [vmem:[%s182 + $0x90] sm:$0xff]
      %v203 = vld [vmem:[%s182 + $0x98] sm:$0xff]
      %v204 = vld [vmem:[%s182 + $0xa0] sm:$0xf]
      %v205 = vld [vmem:[%s182 + $0xa8] sm:$0xf]
      %v206 = vld [vmem:[%s182 + $0xb0] sm:$0xf]
      %v207 = vld [vmem:[%s182 + $0xb8] sm:$0xf]
      %v208 = vld [vmem:[%s182 + $0xc0] sm:$0xf]
      %vm209 = vcmask 293888
      %v211 = vsel %vm209, %v183, 0
      %vm213 = vcmask 1043456
      %v215 = vsel %vm213, %v204, 0
      %v218 = vsel %vm213, %v205, 0
      %v221 = vsel %vm213, %v206, 0
      %v224 = vsel %vm213, %v207, 0
      %v227 = vsel %vm213, %v208, 0
      %229 = vmatprep.subr.mxu0 %v185
      %230 = vmatpush1.msra.mxu0 %v184
      %231 = vmatprep.subr.mxu0 %v190
      %232 = vmatpush1.msra.mxu0 %v189
      %233 = vmatprep.subr.mxu0 %v195
      %234 = vmatpush1.msra.mxu0 %v194
      %235 = vmatprep.subr.mxu0 %v200
      %236 = vmatpush1.msra.mxu0 %v199
      %237 = vmatprep.subr.mxu0 %v218
      %238 = vmatpush1.msra.mxu0 %v215
      %239 = vmatprep.subr.mxu0 0.0
      %240 = vmatpush1.msra.mxu0 0.0
      %241 = vmatprep.subr.mxu0 0.0
      %242 = vmatpush1.msra.mxu0 0.0
      %243 = vmatprep.subr.mxu0 0.0
      %244 = vmatpush1.msra.mxu0 0.0
      %245 = vmatprep.subr.mxu0 0.0
      %246 = vmatpush1.msra.mxu0 0.0
      %247 = vmatprep.subr.mxu0 0.0
      %248 = vmatpush1.msra.mxu0 0.0
      %249 = vmatprep.subr.mxu0 0.0
      %250 = vmatpush1.msra.mxu0 0.0
      %251 = vmatprep.subr.mxu0 0.0
      %252 = vmatpush1.msra.mxu0 0.0
      %253 = vmatprep.subr.mxu0 0.0
      %254 = vmatpush1.msra.mxu0 0.0
      %255 = vmatprep.subr.mxu0 0.0
      %256 = vmatpush1.msra.mxu0 0.0
      %257 = vmatprep.subr.mxu0 0.0
      %258 = vmatpush1.msra.mxu0 0.0
      %259 = vmatprep.subr.mxu0 0.0
      %260 = vmatpush1.msra.mxu0 0.0
      %261 = vmatprep.subr.mxu0 0.0
      %262 = vmatpush1.msra.mxu0 0.0
      %263 = vmatprep.subr.mxu0 0.0
      %264 = vmatpush1.msra.mxu0 0.0
      %265 = vmatprep.subr.mxu0 0.0
      %266 = vmatpush1.msra.mxu0 0.0
      %267 = vmatprep.subr.mxu0 0.0
      %268 = vmatpush1.msra.mxu0 0.0
      %269 = vmatprep.subr.mxu0 0.0
      %270 = vmatpush1.msra.mxu0 0.0
      %271 = vmatprep.subr.mxu0 0.0
      %272 = vmatpush1.msra.mxu0 0.0
      %273 = vmatprep.subr.mxu0 0.0
      %274 = vmatpush1.msra.mxu0 0.0
      %275 = vmatprep.subr.mxu0 0.0
      %276 = vmatpush1.msra.mxu0 0.0
      %277 = vmatprep.subr.mxu0 0.0
      %278 = vmatpush1.msra.mxu0 0.0
      %279 = vmatprep.subr.mxu0 0.0
      %280 = vmatpush1.msra.mxu0 0.0
      %281 = vmatprep.subr.mxu0 0.0
      %282 = vmatpush1.msra.mxu0 0.0
      %283 = vmatprep.subr.mxu0 0.0
      %284 = vmatpush1.msra.mxu0 0.0
      %285 = vmatprep.subr.mxu0 0.0
      %286 = vmatpush1.msra.mxu0 0.0
      %287 = vmatprep.subr.mxu0 0.0
      %288 = vmatpush1.msra.mxu0 0.0
      %289 = vmatprep.subr.mxu0 0.0
      %290 = vmatpush1.msra.mxu0 0.0
      %291 = vmatprep.subr.mxu0 0.0
      %292 = vmatpush1.msra.mxu0 0.0
      %293 = vmatprep.mubr.f32.mxu0 0.0
      %294 = vmatmul.mubr.f32.gmra.mrb[0].mxu0 %v211
      %v295 = vpop.f32.mrb[0].mxu0
      %v296 = vadd.f32 0.0, %v295
      %v297 = vpop.f32.mrb[0].mxu0
      %v298 = vadd.f32 0.0, %v297
      %299 = vdwg.mxu0
      %300 = vmatprep.subr.mxu0 %v187
      %301 = vmatpush1.msra.mxu0 %v186
      %302 = vmatprep.subr.mxu0 %v192
      %303 = vmatpush1.msra.mxu0 %v191
      %304 = vmatprep.subr.mxu0 %v197
      %305 = vmatpush1.msra.mxu0 %v196
      %306 = vmatprep.subr.mxu0 %v202
      %307 = vmatpush1.msra.mxu0 %v201
      %308 = vmatprep.subr.mxu0 %v224
      %309 = vmatpush1.msra.mxu0 %v221
      %310 = vmatprep.subr.mxu0 0.0
      %311 = vmatpush1.msra.mxu0 0.0
      %312 = vmatprep.subr.mxu0 0.0
      %313 = vmatpush1.msra.mxu0 0.0
      %314 = vmatprep.subr.mxu0 0.0
      %315 = vmatpush1.msra.mxu0 0.0
      %316 = vmatprep.subr.mxu0 0.0
      %317 = vmatpush1.msra.mxu0 0.0
      %318 = vmatprep.subr.mxu0 0.0
      %319 = vmatpush1.msra.mxu0 0.0
      %320 = vmatprep.subr.mxu0 0.0
      %321 = vmatpush1.msra.mxu0 0.0
      %322 = vmatprep.subr.mxu0 0.0
      %323 = vmatpush1.msra.mxu0 0.0
      %324 = vmatprep.subr.mxu0 0.0
      %325 = vmatpush1.msra.mxu0 0.0
      %326 = vmatprep.subr.mxu0 0.0
      %327 = vmatpush1.msra.mxu0 0.0
      %328 = vmatprep.subr.mxu0 0.0
      %329 = vmatpush1.msra.mxu0 0.0
      %330 = vmatprep.subr.mxu0 0.0
      %331 = vmatpush1.msra.mxu0 0.0
      %332 = vmatprep.subr.mxu0 0.0
      %333 = vmatpush1.msra.mxu0 0.0
      %334 = vmatprep.subr.mxu0 0.0
      %335 = vmatpush1.msra.mxu0 0.0
      %336 = vmatprep.subr.mxu0 0.0
      %337 = vmatpush1.msra.mxu0 0.0
      %338 = vmatprep.subr.mxu0 0.0
      %339 = vmatpush1.msra.mxu0 0.0
      %340 = vmatprep.subr.mxu0 0.0
      %341 = vmatpush1.msra.mxu0 0.0
      %342 = vmatprep.subr.mxu0 0.0
      %343 = vmatpush1.msra.mxu0 0.0
      %344 = vmatprep.subr.mxu0 0.0
      %345 = vmatpush1.msra.mxu0 0.0
      %346 = vmatprep.subr.mxu0 0.0
      %347 = vmatpush1.msra.mxu0 0.0
      %348 = vmatprep.subr.mxu0 0.0
      %349 = vmatpush1.msra.mxu0 0.0
      %350 = vmatprep.subr.mxu0 0.0
      %351 = vmatpush1.msra.mxu0 0.0
      %352 = vmatprep.subr.mxu0 0.0
      %353 = vmatpush1.msra.mxu0 0.0
      %354 = vmatprep.subr.mxu0 0.0
      %355 = vmatpush1.msra.mxu0 0.0
      %356 = vmatprep.subr.mxu0 0.0
      %357 = vmatpush1.msra.mxu0 0.0
      %358 = vmatprep.subr.mxu0 0.0
      %359 = vmatpush1.msra.mxu0 0.0
      %360 = vmatprep.subr.mxu0 0.0
      %361 = vmatpush1.msra.mxu0 0.0
      %362 = vmatprep.subr.mxu0 0.0
      %363 = vmatpush1.msra.mxu0 0.0
      %364 = vmatprep.mubr.f32.mxu0 0.0
      %365 = vmatmul.mubr.f32.gmra.mrb[0].mxu0 %v211
      %v366 = vpop.f32.mrb[0].mxu0
      %v367 = vadd.f32 0.0, %v366
      %v368 = vpop.f32.mrb[0].mxu0
      %v369 = vadd.f32 0.0, %v368
      %370 = vdwg.mxu0
      %371 = vmatprep.subr.mxu0 0.0
      %372 = vmatpush1.msra.mxu0 %v188
      %373 = vmatprep.subr.mxu0 0.0
      %374 = vmatpush1.msra.mxu0 %v193
      %375 = vmatprep.subr.mxu0 0.0
      %376 = vmatpush1.msra.mxu0 %v198
      %377 = vmatprep.subr.mxu0 0.0
      %378 = vmatpush1.msra.mxu0 %v203
      %379 = vmatprep.subr.mxu0 0.0
      %380 = vmatpush1.msra.mxu0 %v227
      %381 = vmatprep.subr.mxu0 0.0
      %382 = vmatpush1.msra.mxu0 0.0
      %383 = vmatprep.subr.mxu0 0.0
      %384 = vmatpush1.msra.mxu0 0.0
      %385 = vmatprep.subr.mxu0 0.0
      %386 = vmatpush1.msra.mxu0 0.0
      %387 = vmatprep.subr.mxu0 0.0
      %388 = vmatpush1.msra.mxu0 0.0
      %389 = vmatprep.subr.mxu0 0.0
      %390 = vmatpush1.msra.mxu0 0.0
      %391 = vmatprep.subr.mxu0 0.0
      %392 = vmatpush1.msra.mxu0 0.0
      %393 = vmatprep.subr.mxu0 0.0
      %394 = vmatpush1.msra.mxu0 0.0
      %395 = vmatprep.subr.mxu0 0.0
      %396 = vmatpush1.msra.mxu0 0.0
      %397 = vmatprep.subr.mxu0 0.0
      %398 = vmatpush1.msra.mxu0 0.0
      %399 = vmatprep.subr.mxu0 0.0
      %400 = vmatpush1.msra.mxu0 0.0
      %401 = vmatprep.subr.mxu0 0.0
      %402 = vmatpush1.msra.mxu0 0.0
      %403 = vmatprep.subr.mxu0 0.0
      %404 = vmatpush1.msra.mxu0 0.0
      %405 = vmatprep.subr.mxu0 0.0
      %406 = vmatpush1.msra.mxu0 0.0
      %407 = vmatprep.subr.mxu0 0.0
      %408 = vmatpush1.msra.mxu0 0.0
      %409 = vmatprep.subr.mxu0 0.0
      %410 = vmatpush1.msra.mxu0 0.0
      %411 = vmatprep.subr.mxu0 0.0
      %412 = vmatpush1.msra.mxu0 0.0
      %413 = vmatprep.subr.mxu0 0.0
      %414 = vmatpush1.msra.mxu0 0.0
      %415 = vmatprep.subr.mxu0 0.0
      %416 = vmatpush1.msra.mxu0 0.0
      %417 = vmatprep.subr.mxu0 0.0
      %418 = vmatpush1.msra.mxu0 0.0
      %419 = vmatprep.subr.mxu0 0.0
      %420 = vmatpush1.msra.mxu0 0.0
      %421 = vmatprep.subr.mxu0 0.0
      %422 = vmatpush1.msra.mxu0 0.0
      %423 = vmatprep.subr.mxu0 0.0
      %424 = vmatpush1.msra.mxu0 0.0
      %425 = vmatprep.subr.mxu0 0.0
      %426 = vmatpush1.msra.mxu0 0.0
      %427 = vmatprep.subr.mxu0 0.0
      %428 = vmatpush1.msra.mxu0 0.0
      %429 = vmatprep.subr.mxu0 0.0
      %430 = vmatpush1.msra.mxu0 0.0
      %431 = vmatprep.subr.mxu0 0.0
      %432 = vmatpush1.msra.mxu0 0.0
      %433 = vmatprep.subr.mxu0 0.0
      %434 = vmatpush1.msra.mxu0 0.0
      %435 = vmatprep.mubr.f32.mxu0 0.0
      %436 = vmatmul.mubr.f32.gmra.mrb[0].mxu0 %v211
      %v437 = vpop.f32.mrb[0].mxu0
      %v438 = vadd.f32 0.0, %v437
      %v439 = vpop.f32.mrb[0].mxu0
      %440 = vdwg.mxu0
      %v445 = vcombine.low %v296, %v298
      %v446 = vcombine.low %v367, %v369
      %s449 = smul.u32 %s15, 5
      %s450 = smul.addr %s449, 4
      %s451 = scalar_lea.vmem %s4, %s450
      %452 = vst [vmem:[%s451] sm:$0xff] %v445
      %453 = vst [vmem:[%s451 + $0x8] sm:$0xff] %v446
      %vm454 = vcmask 519168
      %455 = vst.msk [vmem:[%s451 + $0x10] sm:$0xf] %vm454, %v438
      %p456 = scmp.eq.s32.totalorder %s15, 1
      // Predicated region
      $region37: #{upsample_module_forward.1} parent=35 // pred_check
        %p457 = pneg %p456
      $region38: #{upsample_module_forward.1} parent=35 // pred_check_branch
        %459 = sbr.rel (%p457) target = $region40
      $region39: #{upsample_module_forward.1} parent=35 // pred_region
        %v460 = vld [vmem:[%s4] sm:$0xff]
        %v461 = vld [vmem:[%s4 + $0x8] sm:$0xff]
        %v462 = vld [vmem:[%s4 + $0x10] sm:$0xf]
        %v463 = vld [vmem:[%s4 + $0x14] sm:$0xff]
        %v464 = vld [vmem:[%s4 + $0x1c] sm:$0xff]
        %v465 = vld [vmem:[%s4 + $0x24] sm:$0xf]
        %v470 = vcombine.high %v460, %v460
        %v471 = vcombine.high %v461, %v461
        %v472 = vcombine.high %v463, %v463
        %v473 = vcombine.high %v464, %v464
        %v478 = vsel %vm213, %v460, 0.0
        %v479 = vsel %vm213, %v470, 0.0
        %v480 = vadd.f32 %v478, %v479
        %v481 = vsel %vm213, %v461, 0.0
        %v482 = vadd.f32 %v480, %v481
        %v483 = vsel %vm213, %v471, 0.0
        %v484 = vadd.f32 %v482, %v483
        %v485 = vsel %vm454, %v462, 0.0
        %v486 = vadd.f32 %v484, %v485
        %487 = vadd.xlane.f32.xlu0 %v486
        %v488 = vpop.xlane.xlu0 %487
        %v489 = vsel %vm213, %v463, 0.0
        %v490 = vsel %vm213, %v472, 0.0
        %v491 = vadd.f32 %v489, %v490
        %v492 = vsel %vm213, %v464, 0.0
        %v493 = vadd.f32 %v491, %v492
        %v494 = vsel %vm213, %v473, 0.0
        %v495 = vadd.f32 %v493, %v494
        %v496 = vsel %vm454, %v465, 0.0
        %v497 = vadd.f32 %v495, %v496
        %498 = vadd.xlane.f32.xlu0 %v497
        %v499 = vpop.xlane.xlu0 %498
        %v500 = vmul.f32 %v460, %v460
        %v501 = vmul.f32 %v461, %v461
        %v502 = vmul.f32 %v462, %v462
        %v503 = vmul.f32 %v463, %v463
        %v504 = vmul.f32 %v464, %v464
        %v505 = vmul.f32 %v465, %v465
        %v510 = vcombine.high %v500, %v500
        %v511 = vcombine.high %v501, %v501
        %v512 = vcombine.high %v503, %v503
        %v513 = vcombine.high %v504, %v504
        %v518 = vsel %vm213, %v500, 0.0
        %v519 = vsel %vm213, %v510, 0.0
        %v520 = vadd.f32 %v518, %v519
        %v521 = vsel %vm213, %v501, 0.0
        %v522 = vadd.f32 %v520, %v521
        %v523 = vsel %vm213, %v511, 0.0
        %v524 = vadd.f32 %v522, %v523
        %v525 = vsel %vm454, %v502, 0.0
        %v526 = vadd.f32 %v524, %v525
        %527 = vadd.xlane.f32.xlu0 %v526
        %v528 = vpop.xlane.xlu0 %527
        %v529 = vsel %vm213, %v503, 0.0
        %v530 = vsel %vm213, %v512, 0.0
        %v531 = vadd.f32 %v529, %v530
        %v532 = vsel %vm213, %v504, 0.0
        %v533 = vadd.f32 %v531, %v532
        %v534 = vsel %vm213, %v513, 0.0
        %v535 = vadd.f32 %v533, %v534
        %v536 = vsel %vm454, %v505, 0.0
        %v537 = vadd.f32 %v535, %v536
        %538 = vadd.xlane.f32.xlu0 %v537
        %v539 = vpop.xlane.xlu0 %538
        %v540 = vsel %vm213, %v488, 0.0
        %v541 = vsel %vm213, %v499, 0.0
        %v542 = vadd.f32 %v540, %v541
        %v543 = vmul.f32 %v542, 0.00086805556
        %v544 = vsel %vm213, %v528, 0.0
        %v545 = vsel %vm213, %v539, 0.0
        %v546 = vadd.f32 %v544, %v545
        %v547 = vmul.f32 %v546, 0.00086805556
        %v548 = vmul.f32 %v543, %v543
        %v549 = vsub.f32 %v547, %v548
        %v550 = vmax.f32 %v549, 0.0
        %v551 = vld [vmem:[%s2] sm:$0xf]
        %v552 = vadd.f32 %v550, 1e-05
        %v553 = vrsqrt.pop %v552
        %v554 = vmul.f32 %v551, %v553
        %v555 = vld [vmem:[%s3] sm:$0xf]
        %v556 = vmul.f32 %v543, %v554
        %v557 = vsub.f32 %v555, %v556
        %559 = vset.pattern.permute.xlu0 0
        %560 = vperm.xlu0 %559, %v554
        %v561 = vpop.permute.xlu0 %560
        %v563 = vunpack.c.l.s4 839922192
        %v564 = vunpack.c.0.s8 %v563
        %v565 = vlaneseq
        %v566 = vshrl.u32 %v565, 7
        %v567 = vsub.s32 %v564, %v566
        %v568 = vrot.slane %v561, %v567
        %v570 = vmul.f32 %v460, %v568
        %v571 = vmul.f32 %v461, %v568
        %v572 = vmul.f32 %v462, %v568
        %v573 = vmul.f32 %v463, %v568
        %v574 = vmul.f32 %v464, %v568
        %v575 = vmul.f32 %v465, %v568
        %577 = vset.pattern.permute.xlu0 0
        %578 = vperm.xlu0 %577, %v557
        %v579 = vpop.permute.xlu0 %578
        %v581 = vunpack.c.l.s4 839922192
        %v582 = vunpack.c.0.s8 %v581
        %v583 = vlaneseq
        %v584 = vshrl.u32 %v583, 7
        %v585 = vsub.s32 %v582, %v584
        %v586 = vrot.slane %v579, %v585
        %v588 = vadd.f32 %v570, %v586
        %v589 = vadd.f32 %v571, %v586
        %v590 = vadd.f32 %v572, %v586
        %v591 = vadd.f32 %v573, %v586
        %v592 = vadd.f32 %v574, %v586
        %v593 = vadd.f32 %v575, %v586
        %v594 = vmax.f32 %v588, 0.0
        %v595 = vmax.f32 %v589, 0.0
        %v596 = vmax.f32 %v590, 0.0
        %v597 = vmax.f32 %v591, 0.0
        %v598 = vmax.f32 %v592, 0.0
        %v599 = vmax.f32 %v593, 0.0
        %600 = vst [vmem:[%s4] sm:$0xff] %v594
        %601 = vst [vmem:[%s4 + $0x8] sm:$0xff] %v595
        %602 = vst.msk [vmem:[%s4 + $0x10] sm:$0xf] %vm454, %v596
        %603 = vst [vmem:[%s4 + $0x14] sm:$0xff] %v597
        %604 = vst [vmem:[%s4 + $0x1c] sm:$0xff] %v598
        %605 = vst.msk [vmem:[%s4 + $0x24] sm:$0xf] %vm454, %v599
      $region40: #{upsample_module_forward.1} parent=35 // pred_fallthru
        _
      // Predicated region
      $region41: #{upsample_module_forward.1} parent=35 // pred_check
        %p606 = pneg %p117
      $region42: #{upsample_module_forward.1} parent=35 // pred_check_branch
        %608 = sbr.rel (%p606) target = $region44
      $region43: #{upsample_module_forward.1} parent=35 // pred_region
        _
      $region44: #{upsample_module_forward.1} parent=35 // pred_fallthru
        _
      // Predicated region
      $region45: #{upsample_module_forward.1} parent=35 // pred_check
        %p609 = pneg %p117
      $region46: #{upsample_module_forward.1} parent=35 // pred_check_branch
        %611 = sbr.rel (%p609) target = $region48
      $region47: #{upsample_module_forward.1} parent=35 // pred_region
        _
      $region48: #{upsample_module_forward.1} parent=35 // pred_fallthru
        _
    $region36: #{upsample_module_forward.1} parent=5 // pred_fallthru
      _
    %p612 = scmp.le.s32.totalorder 2, %s10
    // Predicated region
    $region49: #{upsample_module_forward.1} parent=5 // pred_check
      %p613 = pneg %p612
    $region50: #{upsample_module_forward.1} parent=5 // pred_check_branch
      %615 = sbr.rel (%p613) target = $region52
    $region51: #{upsample_module_forward.1} parent=5 // pred_region
      %s616 = ssub.s32 %s10, 2
    $region52: #{upsample_module_forward.1} parent=5 // pred_fallthru
      _
  $region6: #{upsample_module_forward.1} parent=0 // loop_footer
    %s14 = sadd.s32 1, %s10
  $region7: #{upsample_module_forward.1} parent=0 // loop_footer_branch
    %9 = sbr.rel target = $region3
  $region8: #{upsample_module_forward.1} parent=0 // loop_exit
    _

</llo_original>
